<compile_context>
chip_gen: v7x
topology: tpu7x:2x2x1
jax: 0.10.0
libtpu: 0.0.40
codegen_flags: <defaults>
</compile_context>

<pallas_src>
import functools

import jax
import jax.numpy as jnp
from jax import lax
from jax.experimental import pallas as pl
from jax.experimental.pallas import tpu as pltpu


def _round_up(x, m):
    return ((x + m - 1) // m) * m


def _round_down(x, m):
    return (x // m) * m


_SUBLANE = {4: 8, 2: 16, 1: 32}          # packed sublane tile per itemsize
_POOL_SLABS = 2                          # leading "parallel" axis -> v7x megacore split
_TILE_BYTES = 4 * 1024 * 1024            # target VMEM bytes per x tile (review: 2-4 MiB)
_ONEHOT_CAP = 64 * 1024                  # cap b_pad * tn one-hot elements (vreg pressure)
_VMEM_LIMIT = 32 * 1024 * 1024           # fits v7x 64 MiB physical; > v5e 16 MiB default


# ---------------------------------------------------------------------------
# Kernel 1: per-graph feature sums.  Grid = (slabs, tiles_per_slab); the output
# block depends only on the slab index, so it stays resident across the
# "arbitrary" tile axis and acts as the accumulator (init at j == 0).
# ---------------------------------------------------------------------------
def _pool_kernel(batch_ref, x_ref, psum_ref, *, n_tiles, tiles_per_slab):
    # batch_ref: (1, TN) int32   x_ref: (TN, C)   psum_ref: (B_PAD, C) f32
    p = pl.program_id(0)
    j = pl.program_id(1)

    @pl.when(j == 0)
    def _():
        psum_ref[...] = jnp.zeros_like(psum_ref)

    # Trailing grid steps of the last slab may map to a clamped (duplicate) tile
    # when n_tiles is not a multiple of the slab count: skip the accumulation.
    @pl.when(p * tiles_per_slab + j < n_tiles)
    def _():
        b_pad = psum_ref.shape[0]
        tn = x_ref.shape[0]
        seg = batch_ref[...]                                        # (1, TN)
        gids = lax.broadcasted_iota(jnp.int32, (b_pad, tn), 0)      # (B_PAD, TN)
        onehot = (seg == gids).astype(x_ref.dtype)                  # native dtype -> MXU
        psum_ref[...] += jnp.dot(onehot, x_ref[...],
                                 preferred_element_type=jnp.float32)


# ---------------------------------------------------------------------------
# Kernel 2: out[i] = x[i] * scale[batch[i]] on a folded (lane-dense) view of x:
# each row holds `fold` nodes, so the output last dim is fold*C (>= 128 when
# C < 128), giving dense HBM writeback.  Scale rows are gathered per fold slot
# with a small one-hot matmul; multiply in f32, cast only at the store.
# ---------------------------------------------------------------------------
def _apply_scale_kernel(batch_ref, x_ref, scale_ref, out_ref):
    # batch_ref: (TNF, F) int32   x_ref/out_ref: (TNF, F*C)   scale_ref: (B_PAD, C) f32
    tnf, fold = batch_ref.shape
    b_pad, c = scale_ref.shape
    scale = scale_ref[...]                                          # hoisted, loop-invariant
    gids = lax.broadcasted_iota(jnp.int32, (tnf, b_pad), 1)         # hoisted
    for j in range(fold):                                           # static unroll, fold <= 16
        onehot = (batch_ref[:, j:j + 1] == gids).astype(scale.dtype)   # (TNF, B_PAD)
        ns = jnp.dot(onehot, scale, preferred_element_type=jnp.float32)  # (TNF, C) f32
        xs = x_ref[:, j * c:(j + 1) * c].astype(jnp.float32)
        out_ref[:, j * c:(j + 1) * c] = (xs * ns).astype(out_ref.dtype)


# ---------------------------------------------------------------------------
# Wrapper
# ---------------------------------------------------------------------------
@functools.partial(jax.jit, static_argnames=("num_graphs",))
def graph_se_layer(x, batch, w1, w2, *, num_graphs):
    """x: (N, C) float, batch: (N,) int in [0, num_graphs), w1: (C, H), w2: (H, C)."""
    N, C = x.shape
    assert w1.shape[0] == C and w2.shape[1] == C and w1.shape[1] == w2.shape[0]

    itemsize = jnp.dtype(x.dtype).itemsize
    sub = _SUBLANE.get(itemsize, 8)
    b_pad = _round_up(max(num_graphs, 1), sub)      # dtype-aware sublane padding of graphs

    # Lane-dense fold factor for the apply pass.
    if C < 128 and 128 % C == 0:
        fold = 128 // C
    else:
        fold = 1
        # TODO(synk): C >= 128 but not a multiple of 128 still hits masked partial stores.

    row_align = fold * sub                          # node rows per fold/sublane unit
    align = max(128, row_align)                     # (1, tn) batch block needs tn % 128 == 0
    c_row_bytes = _round_up(C, 128) * itemsize      # lane-padded VMEM bytes per node row
    tn_target = min(_TILE_BYTES // c_row_bytes, _ONEHOT_CAP // max(b_pad, 1))
    tn_target = max(align, _round_down(tn_target, align))

    n_min = _round_up(max(N, 1), row_align)
    if n_min <= tn_target:                          # small problem: single full-extent tile
        tn, n_tiles = n_min, 1
    else:
        tn = tn_target
        n_tiles = -(-N // tn)
    n_pad = n_tiles * tn
    slabs = _POOL_SLABS if n_tiles > 1 else 1
    tiles_per_slab = -(-n_tiles // slabs)

    pad = n_pad - N
    x_p = jnp.pad(x, ((0, pad), (0, 0)))
    # Padded nodes get an out-of-range graph id (b_pad) -> they never hit any one-hot.
    batch_p = jnp.pad(batch.astype(jnp.int32), (0, pad), constant_values=b_pad)

    # ---- pass 1: per-graph feature sums, node-tiled reduction split over slabs ----
    batch_row = batch_p.reshape(1, n_pad)
    kernel1 = functools.partial(_pool_kernel, n_tiles=n_tiles,
                                tiles_per_slab=tiles_per_slab)

    def tile_idx(p, j):
        return jnp.minimum(p * tiles_per_slab + j, n_tiles - 1)

    psum = pl.pallas_call(
        kernel1,
        out_shape=jax.ShapeDtypeStruct((slabs * b_pad, C), jnp.float32),
        grid=(slabs, tiles_per_slab),
        in_specs=[
            pl.BlockSpec((1, tn), lambda p, j: (0, tile_idx(p, j))),    # batch ids
            pl.BlockSpec((tn, C), lambda p, j: (tile_idx(p, j), 0)),    # x node tile
        ],
        out_specs=pl.BlockSpec((b_pad, C), lambda p, j: (p, 0)),        # per-slab accumulator
        compiler_params=pltpu.CompilerParams(
            dimension_semantics=("parallel", "arbitrary"),
            vmem_limit_bytes=_VMEM_LIMIT),
    )(batch_row, x_p)

    # ---- tiny (b_pad, C) epilogue in plain XLA: counts, mean, SE MLP, sigmoid ----
    cnt = jnp.zeros((b_pad, 1), jnp.float32).at[batch.astype(jnp.int32), 0].add(1.0)
    pooled = psum.reshape(slabs, b_pad, C).sum(axis=0) / jnp.maximum(cnt, 1.0)
    h = jnp.maximum(pooled @ w1.astype(jnp.float32), 0.0)
    scale = jax.nn.sigmoid(h @ w2.astype(jnp.float32))                  # (b_pad, C) f32

    # ---- pass 2: per-node rescale on the lane-dense folded layout ----
    nf, tnf = n_pad // fold, tn // fold
    x_fold = x_p.reshape(nf, fold * C)
    batch_fold = batch_p.reshape(nf, fold)

    y_fold = pl.pallas_call(
        _apply_scale_kernel,
        out_shape=jax.ShapeDtypeStruct((nf, fold * C), x.dtype),
        grid=(n_tiles,),
        in_specs=[
            pl.BlockSpec((tnf, fold), lambda i: (i, 0)),                # folded batch ids
            pl.BlockSpec((tnf, fold * C), lambda i: (i, 0)),            # folded x tile
            pl.BlockSpec((b_pad, C), lambda i: (0, 0)),                 # resident scales
        ],
        out_specs=pl.BlockSpec((tnf, fold * C), lambda i: (i, 0)),
        compiler_params=pltpu.CompilerParams(
            dimension_semantics=("parallel",),
            vmem_limit_bytes=_VMEM_LIMIT),
    )(batch_fold, x_fold, scale)

    return y_fold.reshape(n_pad, C)[:N]


class GraphSELayer:
    """JAX/Pallas equivalent of the PyTorch GraphSELayer module."""

    def __init__(self, node_channels, reduction=16, *, key=None, dtype=jnp.float32):
        self.node_channels = node_channels
        self.reduction = reduction
        self.hidden = max(node_channels // reduction, 1)
        if key is None:
            key = jax.random.PRNGKey(0)
        k1, k2 = jax.random.split(key)
        b1 = 1.0 / (node_channels ** 0.5)
        b2 = 1.0 / (self.hidden ** 0.5)
        # Linear weights stored (in_features, out_features), no bias.
        self.w1 = jax.random.uniform(k1, (node_channels, self.hidden), dtype, -b1, b1)
        self.w2 = jax.random.uniform(k2, (self.hidden, node_channels), dtype, -b2, b2)

    def __call__(self, x, batch, num_graphs):
        # num_graphs must be static (JAX needs static shapes; torch infers it
        # from batch.bincount() at runtime).
        return graph_se_layer(x, batch, self.w1, self.w2, num_graphs=num_graphs)


def _reference(x, batch, w1, w2, num_graphs):
    onehot = (batch[None, :] == jnp.arange(num_graphs)[:, None]).astype(jnp.float32)
    pooled = (onehot @ x) / jnp.maximum(onehot.sum(axis=1, keepdims=True), 1.0)
    scale = jax.nn.sigmoid(jnp.maximum(pooled @ w1, 0.0) @ w2)
    return x * scale[batch]


if __name__ == "__main__":
    key = jax.random.PRNGKey(0)
    kx, kp, kx2, kb2 = jax.random.split(key, 4)

    # Test 1: small synthetic graph batch (8 nodes, 32 channels, 2 graphs, reduction 16).
    N, C, B, reduction = 8, 32, 2, 16
    x = jax.random.normal(kx, (N, C), dtype=jnp.float32)
    batch = jnp.array([0, 0, 0, 1, 1, 1, 1, 1], dtype=jnp.int32)

    model = GraphSELayer(node_channels=C, reduction=reduction, key=kp)
    out = jax.block_until_ready(model(x, batch, num_graphs=B))
    ref = _reference(x, batch, model.w1, model.w2, B)
    assert out.shape == (N, C)
    assert jnp.allclose(out, ref, atol=1e-4, rtol=1e-4), float(jnp.max(jnp.abs(out - ref)))

    # Test 2: larger batch exercising multi-tile grids, slab-split pooling and folding.
    N2, B2 = 20000, 5
    x2 = jax.random.normal(kx2, (N2, C), dtype=jnp.float32)
    batch2 = jnp.sort(jax.random.randint(kb2, (N2,), 0, B2)).astype(jnp.int32)
    out2 = jax.block_until_ready(model(x2, batch2, num_graphs=B2))
    ref2 = _reference(x2, batch2, model.w1, model.w2, B2)
    assert out2.shape == (N2, C)
    assert jnp.allclose(out2, ref2, atol=1e-4, rtol=1e-4), float(jnp.max(jnp.abs(out2 - ref2)))

    print("KERNEL_OK")
</pallas_src>

<mosaic_0001>
module attributes {stable_mosaic.version = 11 : i64} {
  func.func @_pool_kernel(%arg0: i32, %arg1: i32, %arg2: memref<1x32xi32, #tpu.memory_space<vmem>>, %arg3: memref<32x32xf32, #tpu.memory_space<vmem>>, %arg4: memref<8x32xf32, #tpu.memory_space<vmem>>) attributes {dimension_semantics = [#tpu.dimension_semantics<parallel>, #tpu.dimension_semantics<arbitrary>], iteration_bounds = array<i64: 1, 1>, scalar_prefetch = 0 : i64, scratch_operands = 0 : i64, tpu.core_type = #tpu.core_type<tc>, window_params = [{transform_indices = @transform_0, window_bounds = array<i64: 1, 32>}, {transform_indices = @transform_1, window_bounds = array<i64: 32, 32>}, {transform_indices = @transform_2, window_bounds = array<i64: 8, 32>}]} {
    %c0_i32 = arith.constant 0 : i32
    %0 = arith.cmpi eq, %arg1, %c0_i32 : i32
    %1 = arith.extui %0 : i1 to i32
    %c0_i32_0 = arith.constant 0 : i32
    %2 = arith.cmpi ne, %1, %c0_i32_0 : i32
    scf.if %2 {
      %cst = arith.constant 0.000000e+00 : f32
      %8 = vector.broadcast %cst : f32 to vector<8x32xf32>
      %c0 = arith.constant 0 : index
      %c0_3 = arith.constant 0 : index
      %9 = vector.load %arg4[%c0, %c0_3] : memref<8x32xf32, #tpu.memory_space<vmem>>, vector<8x32xf32>
      tpu.vector_store %arg4[%c0, %c0_3], %8 {strides = array<i32>} : memref<8x32xf32, #tpu.memory_space<vmem>>, vector<8x32xf32>,
    } else {
    }
    %c1_i32 = arith.constant 1 : i32
    %3 = arith.muli %arg0, %c1_i32 : i32
    %4 = arith.addi %3, %arg1 : i32
    %c1_i32_1 = arith.constant 1 : i32
    %5 = arith.cmpi slt, %4, %c1_i32_1 : i32
    %6 = arith.extui %5 : i1 to i32
    %c0_i32_2 = arith.constant 0 : i32
    %7 = arith.cmpi ne, %6, %c0_i32_2 : i32
    scf.if %7 {
      %c0 = arith.constant 0 : index
      %c0_3 = arith.constant 0 : index
      %8 = vector.load %arg2[%c0, %c0_3] : memref<1x32xi32, #tpu.memory_space<vmem>>, vector<1x32xi32>
      %9 = tpu.iota {dimensions = array<i32: 0>} : vector<8x32xi32>
      %10 = vector.broadcast %8 : vector<1x32xi32> to vector<8x32xi32>
      %11 = arith.cmpi eq, %10, %9 : vector<8x32xi32>
      %12 = arith.extui %11 : vector<8x32xi1> to vector<8x32xi32>
      %13 = arith.sitofp %12 : vector<8x32xi32> to vector<8x32xf32>
      %c0_4 = arith.constant 0 : index
      %c0_5 = arith.constant 0 : index
      %14 = vector.load %arg4[%c0_4, %c0_5] : memref<8x32xf32, #tpu.memory_space<vmem>>, vector<8x32xf32>
      %c0_6 = arith.constant 0 : index
      %c0_7 = arith.constant 0 : index
      %15 = vector.load %arg3[%c0_6, %c0_7] : memref<32x32xf32, #tpu.memory_space<vmem>>, vector<32x32xf32>
      %cst = arith.constant dense<0.000000e+00> : vector<8x32xf32>
      %16 = tpu.matmul %13, %15, %cst {dimension_numbers = #tpu.dot_dimension_numbers<[1], [0], [0], [1], [0, 0, 1, 1], [], []>} : vector<8x32xf32>, vector<32x32xf32>, vector<8x32xf32> -> vector<8x32xf32>
      %17 = arith.addf %14, %16 : vector<8x32xf32>
      %c0_8 = arith.constant 0 : index
      %c0_9 = arith.constant 0 : index
      %18 = vector.load %arg4[%c0_8, %c0_9] : memref<8x32xf32, #tpu.memory_space<vmem>>, vector<8x32xf32>
      tpu.vector_store %arg4[%c0_8, %c0_9], %17 {strides = array<i32>} : memref<8x32xf32, #tpu.memory_space<vmem>>, vector<8x32xf32>,
    } else {
    }
    return
  }
  func.func @transform_0(%arg0: i32, %arg1: i32) -> (i32, i32) {
    %c1_i32 = arith.constant 1 : i32
    %0 = arith.muli %arg0, %c1_i32 : i32
    %1 = arith.addi %0, %arg1 : i32
    %c0_i32 = arith.constant 0 : i32
    %2 = arith.minsi %1, %c0_i32 : i32
    %c0_i32_0 = arith.constant 0 : i32
    %c0_i32_1 = arith.constant 0 : i32
    return %c0_i32_0, %2 : i32, i32
  }
  func.func @transform_1(%arg0: i32, %arg1: i32) -> (i32, i32) {
    %c1_i32 = arith.constant 1 : i32
    %0 = arith.muli %arg0, %c1_i32 : i32
    %1 = arith.addi %0, %arg1 : i32
    %c0_i32 = arith.constant 0 : i32
    %2 = arith.minsi %1, %c0_i32 : i32
    %c0_i32_0 = arith.constant 0 : i32
    %c0_i32_1 = arith.constant 0 : i32
    return %2, %c0_i32_0 : i32, i32
  }
  func.func @transform_2(%arg0: i32, %arg1: i32) -> (i32, i32) {
    %c0_i32 = arith.constant 0 : i32
    %c0_i32_0 = arith.constant 0 : i32
    return %arg0, %c0_i32 : i32, i32
  }
}

module attributes {stable_mosaic.version = 11 : i64} {
  func.func @_apply_scale_kernel(%arg0: i32, %arg1: memref<8x4xi32, #tpu.memory_space<vmem>>, %arg2: memref<8x128xf32, #tpu.memory_space<vmem>>, %arg3: memref<8x32xf32, #tpu.memory_space<vmem>>, %arg4: memref<8x128xf32, #tpu.memory_space<vmem>>) attributes {dimension_semantics = [#tpu.dimension_semantics<parallel>], iteration_bounds = array<i64: 1>, scalar_prefetch = 0 : i64, scratch_operands = 0 : i64, tpu.core_type = #tpu.core_type<tc>, window_params = [{transform_indices = @transform_0, window_bounds = array<i64: 8, 4>}, {transform_indices = @transform_1, window_bounds = array<i64: 8, 128>}, {pipeline_mode = #tpu.pipeline_mode<synchronous>, transform_indices = @transform_2, window_bounds = array<i64: 8, 32>}, {transform_indices = @transform_3, window_bounds = array<i64: 8, 128>}]} {
    %c0 = arith.constant 0 : index
    %c0_0 = arith.constant 0 : index
    %0 = vector.load %arg3[%c0, %c0_0] : memref<8x32xf32, #tpu.memory_space<vmem>>, vector<8x32xf32>
    %1 = tpu.iota {dimensions = array<i32: 1>} : vector<8x8xi32>
    %c0_1 = arith.constant 0 : index
    %c0_2 = arith.constant 0 : index
    %2 = vector.load %arg1[%c0_1, %c0_2] : memref<8x4xi32, #tpu.memory_space<vmem>>, vector<8x1xi32>
    %3 = vector.broadcast %2 : vector<8x1xi32> to vector<8x8xi32>
    %4 = arith.cmpi eq, %3, %1 : vector<8x8xi32>
    %5 = arith.extui %4 : vector<8x8xi1> to vector<8x8xi32>
    %6 = arith.sitofp %5 : vector<8x8xi32> to vector<8x8xf32>
    %cst = arith.constant dense<0.000000e+00> : vector<8x32xf32>
    %7 = tpu.matmul %6, %0, %cst {dimension_numbers = #tpu.dot_dimension_numbers<[1], [0], [0], [1], [0, 0, 1, 1], [], []>} : vector<8x8xf32>, vector<8x32xf32>, vector<8x32xf32> -> vector<8x32xf32>
    %c0_3 = arith.constant 0 : index
    %c0_4 = arith.constant 0 : index
    %8 = vector.load %arg2[%c0_3, %c0_4] : memref<8x128xf32, #tpu.memory_space<vmem>>, vector<8x32xf32>
    %9 = arith.mulf %8, %7 : vector<8x32xf32>
    %c0_5 = arith.constant 0 : index
    %c0_6 = arith.constant 0 : index
    %10 = vector.load %arg4[%c0_5, %c0_6] : memref<8x128xf32, #tpu.memory_space<vmem>>, vector<8x32xf32>
    tpu.vector_store %arg4[%c0_5, %c0_6], %9 {strides = array<i32>} : memref<8x128xf32, #tpu.memory_space<vmem>>, vector<8x32xf32>,
    %c0_7 = arith.constant 0 : index
    %c1 = arith.constant 1 : index
    %11 = vector.load %arg1[%c0_7, %c1] : memref<8x4xi32, #tpu.memory_space<vmem>>, vector<8x1xi32>
    %12 = vector.broadcast %11 : vector<8x1xi32> to vector<8x8xi32>
    %13 = arith.cmpi eq, %12, %1 : vector<8x8xi32>
    %14 = arith.extui %13 : vector<8x8xi1> to vector<8x8xi32>
    %15 = arith.sitofp %14 : vector<8x8xi32> to vector<8x8xf32>
    %cst_8 = arith.constant dense<0.000000e+00> : vector<8x32xf32>
    %16 = tpu.matmul %15, %0, %cst_8 {dimension_numbers = #tpu.dot_dimension_numbers<[1], [0], [0], [1], [0, 0, 1, 1], [], []>} : vector<8x8xf32>, vector<8x32xf32>, vector<8x32xf32> -> vector<8x32xf32>
    %c0_9 = arith.constant 0 : index
    %c32 = arith.constant 32 : index
    %17 = vector.load %arg2[%c0_9, %c32] : memref<8x128xf32, #tpu.memory_space<vmem>>, vector<8x32xf32>
    %18 = arith.mulf %17, %16 : vector<8x32xf32>
    %c0_10 = arith.constant 0 : index
    %c32_11 = arith.constant 32 : index
    %19 = vector.load %arg4[%c0_10, %c32_11] : memref<8x128xf32, #tpu.memory_space<vmem>>, vector<8x32xf32>
    tpu.vector_store %arg4[%c0_10, %c32_11], %18 {strides = array<i32>} : memref<8x128xf32, #tpu.memory_space<vmem>>, vector<8x32xf32>,
    %c0_12 = arith.constant 0 : index
    %c2 = arith.constant 2 : index
    %20 = vector.load %arg1[%c0_12, %c2] : memref<8x4xi32, #tpu.memory_space<vmem>>, vector<8x1xi32>
    %21 = vector.broadcast %20 : vector<8x1xi32> to vector<8x8xi32>
    %22 = arith.cmpi eq, %21, %1 : vector<8x8xi32>
    %23 = arith.extui %22 : vector<8x8xi1> to vector<8x8xi32>
    %24 = arith.sitofp %23 : vector<8x8xi32> to vector<8x8xf32>
    %cst_13 = arith.constant dense<0.000000e+00> : vector<8x32xf32>
    %25 = tpu.matmul %24, %0, %cst_13 {dimension_numbers = #tpu.dot_dimension_numbers<[1], [0], [0], [1], [0, 0, 1, 1], [], []>} : vector<8x8xf32>, vector<8x32xf32>, vector<8x32xf32> -> vector<8x32xf32>
    %c0_14 = arith.constant 0 : index
    %c64 = arith.constant 64 : index
    %26 = vector.load %arg2[%c0_14, %c64] : memref<8x128xf32, #tpu.memory_space<vmem>>, vector<8x32xf32>
    %27 = arith.mulf %26, %25 : vector<8x32xf32>
    %c0_15 = arith.constant 0 : index
    %c64_16 = arith.constant 64 : index
    %28 = vector.load %arg4[%c0_15, %c64_16] : memref<8x128xf32, #tpu.memory_space<vmem>>, vector<8x32xf32>
    tpu.vector_store %arg4[%c0_15, %c64_16], %27 {strides = array<i32>} : memref<8x128xf32, #tpu.memory_space<vmem>>, vector<8x32xf32>,
    %c0_17 = arith.constant 0 : index
    %c3 = arith.constant 3 : index
    %29 = vector.load %arg1[%c0_17, %c3] : memref<8x4xi32, #tpu.memory_space<vmem>>, vector<8x1xi32>
    %30 = vector.broadcast %29 : vector<8x1xi32> to vector<8x8xi32>
    %31 = arith.cmpi eq, %30, %1 : vector<8x8xi32>
    %32 = arith.extui %31 : vector<8x8xi1> to vector<8x8xi32>
    %33 = arith.sitofp %32 : vector<8x8xi32> to vector<8x8xf32>
    %cst_18 = arith.constant dense<0.000000e+00> : vector<8x32xf32>
    %34 = tpu.matmul %33, %0, %cst_18 {dimension_numbers = #tpu.dot_dimension_numbers<[1], [0], [0], [1], [0, 0, 1, 1], [], []>} : vector<8x8xf32>, vector<8x32xf32>, vector<8x32xf32> -> vector<8x32xf32>
    %c0_19 = arith.constant 0 : index
    %c96 = arith.constant 96 : index
    %35 = vector.load %arg2[%c0_19, %c96] : memref<8x128xf32, #tpu.memory_space<vmem>>, vector<8x32xf32>
    %36 = arith.mulf %35, %34 : vector<8x32xf32>
    %c0_20 = arith.constant 0 : index
    %c96_21 = arith.constant 96 : index
    %37 = vector.load %arg4[%c0_20, %c96_21] : memref<8x128xf32, #tpu.memory_space<vmem>>, vector<8x32xf32>
    tpu.vector_store %arg4[%c0_20, %c96_21], %36 {strides = array<i32>} : memref<8x128xf32, #tpu.memory_space<vmem>>, vector<8x32xf32>,
    return
  }
  func.func @transform_0(%arg0: i32) -> (i32, i32) {
    %c0_i32 = arith.constant 0 : i32
    %c0_i32_0 = arith.constant 0 : i32
    return %arg0, %c0_i32 : i32, i32
  }
  func.func @transform_1(%arg0: i32) -> (i32, i32) {
    %c0_i32 = arith.constant 0 : i32
    %c0_i32_0 = arith.constant 0 : i32
    return %arg0, %c0_i32 : i32, i32
  }
  func.func @transform_2(%arg0: i32) -> (i32, i32) {
    %c0_i32 = arith.constant 0 : i32
    %c0_i32_0 = arith.constant 0 : i32
    %c0_i32_1 = arith.constant 0 : i32
    return %c0_i32, %c0_i32_0 : i32, i32
  }
  func.func @transform_3(%arg0: i32) -> (i32, i32) {
    %c0_i32 = arith.constant 0 : i32
    %c0_i32_0 = arith.constant 0 : i32
    return %arg0, %c0_i32 : i32, i32
  }
}

</mosaic_0001>

<llo_original>
// kernel: graph_se_layer.2
$region0: #{graph_se_layer.2}
  #allocation0 [shape = 'u32[]', space=smem, size = 0x4, offset = 0x4, fixed_abs, tag = 'smem constant byte address 0x4 - core index']
  #allocation1 [shape = 'u32[144,128]{1,0:T(1,128)}', space=vmem, size = 0x12000, scoped, tag = 'internal scratch']
  %s0 = inlined_call_operand.vmem [shape: s32[1,32], index: 0, kind: input, shape index: {}]
  %s1 = inlined_call_operand.vmem [shape: f32[32,32], index: 1, kind: input, shape index: {}]
  %s2 = inlined_call_operand.vmem [shape: f32[8,32], index: 2, kind: output, shape index: {}]
  %s3 = sld [smem:[#allocation0]]
  $region26: #{graph_se_layer.2} parent=0
    _
  %s5 = ssub.s32 1, %s3
  %s6 = scalar_select 0, %s5, %s3
  // Predicated region
  $region2: #{graph_se_layer.2} parent=0 // pred_check
    _
  $region3: #{graph_se_layer.2} parent=0 // pred_check_branch
    %8 = sbr.rel (0) target = $region5
  $region4: #{graph_se_layer.2} parent=0 // pred_region
    %s9 = sadd.s32 0, 0
    %p10 = scmp.lt.s32.totalorder %s9, 0
    %s11 = scalar_select %p10, %s9, 0
    %p12 = scmp.lt.s32.totalorder %s11, 0
    %s13 = scalar_select %p12, %s11, 0
    %s14 = scalar_lea.vmem %s0, %s13
    %s15 = sadd.s32 0, 0
    %p16 = scmp.lt.s32.totalorder %s15, 0
    %s17 = scalar_select %p16, %s15, 0
  $region5: #{graph_se_layer.2} parent=0 // pred_fallthru
    _
  // Predicated region
  $region6: #{graph_se_layer.2} parent=0 // pred_check
    _
  $region7: #{graph_se_layer.2} parent=0 // pred_check_branch
    %19 = sbr.rel (0) target = $region9
  $region8: #{graph_se_layer.2} parent=0 // pred_region
    %s20 = sadd.s32 0, 0
    %p21 = scmp.lt.s32.totalorder %s20, 0
    %s22 = scalar_select %p21, %s20, 0
    %s23 = smul.u32 4, %s22
    %p24 = scmp.lt.s32.totalorder %s23, 3
    %s25 = scalar_select %p24, %s23, 3
    %s26 = smul.addr %s25, 8
    %s27 = scalar_lea.vmem %s1, %s26
    %s28 = sadd.s32 0, 0
    %p29 = scmp.lt.s32.totalorder %s28, 0
    %s30 = scalar_select %p29, %s28, 0
    %s31 = smul.u32 4, %s30
  $region9: #{graph_se_layer.2} parent=0 // pred_fallthru
    _
  %s32 = sadd.s32 0, 0
  %p33 = scmp.lt.s32.totalorder %s32, 0
  %s34 = scalar_select %p33, %s32, 0
  %p35 = scmp.lt.s32.totalorder %s34, 0
  %s36 = scalar_select %p35, %s34, 0
  %s37 = scalar_lea.vmem %s0, %s36
  %s38 = sadd.s32 0, 0
  %p39 = scmp.lt.s32.totalorder %s38, 0
  %s40 = scalar_select %p39, %s38, 0
  %s41 = smul.u32 4, %s40
  %p42 = scmp.lt.s32.totalorder %s41, 3
  %s43 = scalar_select %p42, %s41, 3
  %s44 = smul.addr %s43, 8
  %s45 = scalar_lea.vmem %s1, %s44
  %s46 = sadd.s32 0, 0
  %p47 = scmp.lt.s32.totalorder %s46, 0
  %s48 = scalar_select %p47, %s46, 0
  %p49 = scmp.lt.s32.totalorder %s48, 0
  %s50 = scalar_select %p49, %s48, 0
  %s51 = scalar_lea.vmem %s0, %s50
  %s52 = sadd.s32 0, 0
  %p53 = scmp.lt.s32.totalorder %s52, 0
  %s54 = scalar_select %p53, %s52, 0
  %s55 = sadd.s32 0, 0
  %p56 = scmp.lt.s32.totalorder %s55, 0
  %s57 = scalar_select %p56, %s55, 0
  %s58 = smul.u32 4, %s57
  %p59 = scmp.lt.s32.totalorder %s58, 3
  %s60 = scalar_select %p59, %s58, 3
  %s61 = smul.addr %s60, 8
  %s62 = scalar_lea.vmem %s1, %s61
  %s63 = sadd.s32 0, 0
  %p64 = scmp.lt.s32.totalorder %s63, 0
  %s65 = scalar_select %p64, %s63, 0
  %s66 = smul.u32 4, %s65
  %p67 = scmp.eq.s32.totalorder 0, 0
  // Predicated region
  $region10: #{graph_se_layer.2} parent=0 // pred_check
    %p68 = pneg %p67
  $region11: #{graph_se_layer.2} parent=0 // pred_check_branch
    %70 = sbr.rel (%p68) target = $region13
  $region12: #{graph_se_layer.2} parent=0 // pred_region
    %vm71 = vcmask 261120
    %72 = vst.msk [vmem:[%s2] sm:$0xff] %vm71, 0.0
  $region13: #{graph_se_layer.2} parent=0 // pred_fallthru
    _
  %s73 = sadd.s32 0, 0
  %p74 = scmp.lt.s32.totalorder %s73, 1
  // Predicated region
  $region14: #{graph_se_layer.2} parent=0 // pred_check
    %p75 = pneg %p74
  $region15: #{graph_se_layer.2} parent=0 // pred_check_branch
    %77 = sbr.rel (%p75) target = $region17
  $region16: #{graph_se_layer.2} parent=0 // pred_region
    %v78 = vld [vmem:[%s51] sm:$0x1]
    %v79 = vlaneseq
    %v80 = vshrl.u32 %v79, 7
    %v81 = vlaneseq
    %v82 = vshrl.u32 %v81, 7
    %v83 = vsub.s32 0, %v82
    %v84 = vrot.slane %v78, %v83
    %vm85 = vcmp.eq.s32.totalorder %v84, %v80
    %v86 = vsel %vm85, 1, 0
    %v87 = vcvt.s32.f32 %v86
    %v88 = vld [vmem:[%s2] sm:$0xff]
    %v89 = vld [vmem:[%s62] sm:$0xff]
    %v90 = vld [vmem:[%s62 + $0x8] sm:$0xff]
    %v91 = vld [vmem:[%s62 + $0x10] sm:$0xff]
    %v92 = vld [vmem:[%s62 + $0x18] sm:$0xff]
    %vm93 = vcmask 261120
    %v95 = vsel %vm93, %v87, 0
    %97 = vmatprep.subr.mxu0 0.0
    %98 = vmatpush1.msra.mxu0 %v89
    %99 = vmatprep.subr.mxu0 0.0
    %100 = vmatpush1.msra.mxu0 %v90
    %101 = vmatprep.subr.mxu0 0.0
    %102 = vmatpush1.msra.mxu0 %v91
    %103 = vmatprep.subr.mxu0 0.0
    %104 = vmatpush1.msra.mxu0 %v92
    %105 = vmatprep.subr.mxu0 0.0
    %106 = vmatpush1.msra.mxu0 0.0
    %107 = vmatprep.subr.mxu0 0.0
    %108 = vmatpush1.msra.mxu0 0.0
    %109 = vmatprep.subr.mxu0 0.0
    %110 = vmatpush1.msra.mxu0 0.0
    %111 = vmatprep.subr.mxu0 0.0
    %112 = vmatpush1.msra.mxu0 0.0
    %113 = vmatprep.subr.mxu0 0.0
    %114 = vmatpush1.msra.mxu0 0.0
    %115 = vmatprep.subr.mxu0 0.0
    %116 = vmatpush1.msra.mxu0 0.0
    %117 = vmatprep.subr.mxu0 0.0
    %118 = vmatpush1.msra.mxu0 0.0
    %119 = vmatprep.subr.mxu0 0.0
    %120 = vmatpush1.msra.mxu0 0.0
    %121 = vmatprep.subr.mxu0 0.0
    %122 = vmatpush1.msra.mxu0 0.0
    %123 = vmatprep.subr.mxu0 0.0
    %124 = vmatpush1.msra.mxu0 0.0
    %125 = vmatprep.subr.mxu0 0.0
    %126 = vmatpush1.msra.mxu0 0.0
    %127 = vmatprep.subr.mxu0 0.0
    %128 = vmatpush1.msra.mxu0 0.0
    %129 = vmatprep.subr.mxu0 0.0
    %130 = vmatpush1.msra.mxu0 0.0
    %131 = vmatprep.subr.mxu0 0.0
    %132 = vmatpush1.msra.mxu0 0.0
    %133 = vmatprep.subr.mxu0 0.0
    %134 = vmatpush1.msra.mxu0 0.0
    %135 = vmatprep.subr.mxu0 0.0
    %136 = vmatpush1.msra.mxu0 0.0
    %137 = vmatprep.subr.mxu0 0.0
    %138 = vmatpush1.msra.mxu0 0.0
    %139 = vmatprep.subr.mxu0 0.0
    %140 = vmatpush1.msra.mxu0 0.0
    %141 = vmatprep.subr.mxu0 0.0
    %142 = vmatpush1.msra.mxu0 0.0
    %143 = vmatprep.subr.mxu0 0.0
    %144 = vmatpush1.msra.mxu0 0.0
    %145 = vmatprep.subr.mxu0 0.0
    %146 = vmatpush1.msra.mxu0 0.0
    %147 = vmatprep.subr.mxu0 0.0
    %148 = vmatpush1.msra.mxu0 0.0
    %149 = vmatprep.subr.mxu0 0.0
    %150 = vmatpush1.msra.mxu0 0.0
    %151 = vmatprep.subr.mxu0 0.0
    %152 = vmatpush1.msra.mxu0 0.0
    %153 = vmatprep.subr.mxu0 0.0
    %154 = vmatpush1.msra.mxu0 0.0
    %155 = vmatprep.subr.mxu0 0.0
    %156 = vmatpush1.msra.mxu0 0.0
    %157 = vmatprep.subr.mxu0 0.0
    %158 = vmatpush1.msra.mxu0 0.0
    %159 = vmatprep.subr.mxu0 0.0
    %160 = vmatpush1.msra.mxu0 0.0
    %161 = vmatprep.mubr.f32.mxu0 0.0
    %162 = vmatmul.mubr.f32.gmra.mrb[0].mxu0 %v95
    %v163 = vpop.f32.mrb[0].mxu0
    %v164 = vadd.f32 0.0, %v163
    %v165 = vpop.f32.mrb[0].mxu0
    %166 = vdwg.mxu0
    %v167 = vadd.f32 %v88, %v164
    %168 = vst.msk [vmem:[%s2] sm:$0xff] %vm93, %v167
  $region17: #{graph_se_layer.2} parent=0 // pred_fallthru
    _
  // Predicated region
  $region18: #{graph_se_layer.2} parent=0 // pred_check
    _
  $region19: #{graph_se_layer.2} parent=0 // pred_check_branch
    %170 = sbr.rel (0) target = $region21
  $region20: #{graph_se_layer.2} parent=0 // pred_region
    _
  $region21: #{graph_se_layer.2} parent=0 // pred_fallthru
    _
  // Predicated region
  $region22: #{graph_se_layer.2} parent=0 // pred_check
    _
  $region23: #{graph_se_layer.2} parent=0 // pred_check_branch
    %172 = sbr.rel (0) target = $region25
  $region24: #{graph_se_layer.2} parent=0 // pred_region
    _
  $region25: #{graph_se_layer.2} parent=0 // pred_fallthru
    _

// kernel: graph_se_layer.3
$region0: #{graph_se_layer.3}
  #allocation0 [shape = 'u32[]', space=smem, size = 0x4, offset = 0x4, fixed_abs, tag = 'smem constant byte address 0x4 - core index']
  #allocation1 [shape = 'u32[144,128]{1,0:T(1,128)}', space=vmem, size = 0x12000, scoped, tag = 'internal scratch']
  %s0 = inlined_call_operand.vmem [shape: s32[8,4], index: 0, kind: input, shape index: {}]
  %s1 = inlined_call_operand.vmem [shape: f32[8,128], index: 1, kind: input, shape index: {}]
  %s2 = inlined_call_operand.vmem [shape: f32[8,32], index: 2, kind: input, shape index: {}]
  %s3 = inlined_call_operand.vmem [shape: f32[8,128], index: 3, kind: output, shape index: {}]
  %s4 = sld [smem:[#allocation0]]
  $region22: #{graph_se_layer.3} parent=0
    _
  %s6 = ssub.s32 1, %s4
  %s7 = scalar_select 0, %s6, %s4
  // Predicated region
  $region2: #{graph_se_layer.3} parent=0 // pred_check
    _
  $region3: #{graph_se_layer.3} parent=0 // pred_check_branch
    %9 = sbr.rel (0) target = $region5
  $region4: #{graph_se_layer.3} parent=0 // pred_region
    _
  $region5: #{graph_se_layer.3} parent=0 // pred_fallthru
    _
  // Predicated region
  $region6: #{graph_se_layer.3} parent=0 // pred_check
    _
  $region7: #{graph_se_layer.3} parent=0 // pred_check_branch
    %11 = sbr.rel (0) target = $region9
  $region8: #{graph_se_layer.3} parent=0 // pred_region
    _
  $region9: #{graph_se_layer.3} parent=0 // pred_fallthru
    _
  // Predicated region
  $region10: #{graph_se_layer.3} parent=0 // pred_check
    _
  $region11: #{graph_se_layer.3} parent=0 // pred_check_branch
    %13 = sbr.rel (0) target = $region13
  $region12: #{graph_se_layer.3} parent=0 // pred_region
    _
  $region13: #{graph_se_layer.3} parent=0 // pred_fallthru
    _
  %v14 = vld [vmem:[%s2] sm:$0xff]
  %v15 = vlaneseq
  %v16 = vand.u32 %v15, 127
  %v17 = vld [vmem:[%s0] sm:$0xff]
  %18 = vset.pattern.permute.xlu0 0
  %19 = vperm.xlu0 %18, %v17
  %v20 = vpop.permute.xlu0 %19
  %vm21 = vcmp.eq.s32.totalorder %v20, %v16
  %v22 = vsel %vm21, 1, 0
  %v23 = vcvt.s32.f32 %v22
  %vm24 = vcmask 64512
  %v26 = vsel %vm24, %v23, 0
  %28 = vmatprep.subr.mxu0 0.0
  %29 = vmatpush1.msra.mxu0 %v14
  %30 = vmatprep.subr.mxu0 0.0
  %31 = vmatpush1.msra.mxu0 0.0
  %32 = vmatprep.subr.mxu0 0.0
  %33 = vmatpush1.msra.mxu0 0.0
  %34 = vmatprep.subr.mxu0 0.0
  %35 = vmatpush1.msra.mxu0 0.0
  %36 = vmatprep.subr.mxu0 0.0
  %37 = vmatpush1.msra.mxu0 0.0
  %38 = vmatprep.subr.mxu0 0.0
  %39 = vmatpush1.msra.mxu0 0.0
  %40 = vmatprep.subr.mxu0 0.0
  %41 = vmatpush1.msra.mxu0 0.0
  %42 = vmatprep.subr.mxu0 0.0
  %43 = vmatpush1.msra.mxu0 0.0
  %44 = vmatprep.subr.mxu0 0.0
  %45 = vmatpush1.msra.mxu0 0.0
  %46 = vmatprep.subr.mxu0 0.0
  %47 = vmatpush1.msra.mxu0 0.0
  %48 = vmatprep.subr.mxu0 0.0
  %49 = vmatpush1.msra.mxu0 0.0
  %50 = vmatprep.subr.mxu0 0.0
  %51 = vmatpush1.msra.mxu0 0.0
  %52 = vmatprep.subr.mxu0 0.0
  %53 = vmatpush1.msra.mxu0 0.0
  %54 = vmatprep.subr.mxu0 0.0
  %55 = vmatpush1.msra.mxu0 0.0
  %56 = vmatprep.subr.mxu0 0.0
  %57 = vmatpush1.msra.mxu0 0.0
  %58 = vmatprep.subr.mxu0 0.0
  %59 = vmatpush1.msra.mxu0 0.0
  %60 = vmatprep.subr.mxu0 0.0
  %61 = vmatpush1.msra.mxu0 0.0
  %62 = vmatprep.subr.mxu0 0.0
  %63 = vmatpush1.msra.mxu0 0.0
  %64 = vmatprep.subr.mxu0 0.0
  %65 = vmatpush1.msra.mxu0 0.0
  %66 = vmatprep.subr.mxu0 0.0
  %67 = vmatpush1.msra.mxu0 0.0
  %68 = vmatprep.subr.mxu0 0.0
  %69 = vmatpush1.msra.mxu0 0.0
  %70 = vmatprep.subr.mxu0 0.0
  %71 = vmatpush1.msra.mxu0 0.0
  %72 = vmatprep.subr.mxu0 0.0
  %73 = vmatpush1.msra.mxu0 0.0
  %74 = vmatprep.subr.mxu0 0.0
  %75 = vmatpush1.msra.mxu0 0.0
  %76 = vmatprep.subr.mxu0 0.0
  %77 = vmatpush1.msra.mxu0 0.0
  %78 = vmatprep.subr.mxu0 0.0
  %79 = vmatpush1.msra.mxu0 0.0
  %80 = vmatprep.subr.mxu0 0.0
  %81 = vmatpush1.msra.mxu0 0.0
  %82 = vmatprep.subr.mxu0 0.0
  %83 = vmatpush1.msra.mxu0 0.0
  %84 = vmatprep.subr.mxu0 0.0
  %85 = vmatpush1.msra.mxu0 0.0
  %86 = vmatprep.subr.mxu0 0.0
  %87 = vmatpush1.msra.mxu0 0.0
  %88 = vmatprep.subr.mxu0 0.0
  %89 = vmatpush1.msra.mxu0 0.0
  %90 = vmatprep.subr.mxu0 0.0
  %91 = vmatpush1.msra.mxu0 0.0
  %92 = vmatprep.mubr.f32.mxu0 0.0
  %93 = vmatmul.mubr.f32.gmra.mrb[0].mxu0 %v26
  %v94 = vpop.f32.mrb[0].mxu0
  %v95 = vadd.f32 0.0, %v94
  %v96 = vpop.f32.mrb[0].mxu0
  %97 = vdwg.mxu0
  %v98 = vld [vmem:[%s1] sm:$0xff]
  %v99 = vmul.f32 %v98, %v95
  %vm100 = vcmask 261120
  %101 = vst.msk [vmem:[%s3] sm:$0xff] %vm100, %v99
  %v102 = vld [vmem:[%s0] sm:$0xff]
  %103 = vset.pattern.permute.xlu0 1
  %104 = vperm.xlu0 %103, %v102
  %v105 = vpop.permute.xlu0 %104
  %vm106 = vcmp.eq.s32.totalorder %v105, %v16
  %v107 = vsel %vm106, 1, 0
  %v108 = vcvt.s32.f32 %v107
  %v110 = vsel %vm24, %v108, 0
  %112 = vmatprep.subr.mxu0 0.0
  %113 = vmatpush1.msra.mxu0 %v14
  %114 = vmatprep.subr.mxu0 0.0
  %115 = vmatpush1.msra.mxu0 0.0
  %116 = vmatprep.subr.mxu0 0.0
  %117 = vmatpush1.msra.mxu0 0.0
  %118 = vmatprep.subr.mxu0 0.0
  %119 = vmatpush1.msra.mxu0 0.0
  %120 = vmatprep.subr.mxu0 0.0
  %121 = vmatpush1.msra.mxu0 0.0
  %122 = vmatprep.subr.mxu0 0.0
  %123 = vmatpush1.msra.mxu0 0.0
  %124 = vmatprep.subr.mxu0 0.0
  %125 = vmatpush1.msra.mxu0 0.0
  %126 = vmatprep.subr.mxu0 0.0
  %127 = vmatpush1.msra.mxu0 0.0
  %128 = vmatprep.subr.mxu0 0.0
  %129 = vmatpush1.msra.mxu0 0.0
  %130 = vmatprep.subr.mxu0 0.0
  %131 = vmatpush1.msra.mxu0 0.0
  %132 = vmatprep.subr.mxu0 0.0
  %133 = vmatpush1.msra.mxu0 0.0
  %134 = vmatprep.subr.mxu0 0.0
  %135 = vmatpush1.msra.mxu0 0.0
  %136 = vmatprep.subr.mxu0 0.0
  %137 = vmatpush1.msra.mxu0 0.0
  %138 = vmatprep.subr.mxu0 0.0
  %139 = vmatpush1.msra.mxu0 0.0
  %140 = vmatprep.subr.mxu0 0.0
  %141 = vmatpush1.msra.mxu0 0.0
  %142 = vmatprep.subr.mxu0 0.0
  %143 = vmatpush1.msra.mxu0 0.0
  %144 = vmatprep.subr.mxu0 0.0
  %145 = vmatpush1.msra.mxu0 0.0
  %146 = vmatprep.subr.mxu0 0.0
  %147 = vmatpush1.msra.mxu0 0.0
  %148 = vmatprep.subr.mxu0 0.0
  %149 = vmatpush1.msra.mxu0 0.0
  %150 = vmatprep.subr.mxu0 0.0
  %151 = vmatpush1.msra.mxu0 0.0
  %152 = vmatprep.subr.mxu0 0.0
  %153 = vmatpush1.msra.mxu0 0.0
  %154 = vmatprep.subr.mxu0 0.0
  %155 = vmatpush1.msra.mxu0 0.0
  %156 = vmatprep.subr.mxu0 0.0
  %157 = vmatpush1.msra.mxu0 0.0
  %158 = vmatprep.subr.mxu0 0.0
  %159 = vmatpush1.msra.mxu0 0.0
  %160 = vmatprep.subr.mxu0 0.0
  %161 = vmatpush1.msra.mxu0 0.0
  %162 = vmatprep.subr.mxu0 0.0
  %163 = vmatpush1.msra.mxu0 0.0
  %164 = vmatprep.subr.mxu0 0.0
  %165 = vmatpush1.msra.mxu0 0.0
  %166 = vmatprep.subr.mxu0 0.0
  %167 = vmatpush1.msra.mxu0 0.0
  %168 = vmatprep.subr.mxu0 0.0
  %169 = vmatpush1.msra.mxu0 0.0
  %170 = vmatprep.subr.mxu0 0.0
  %171 = vmatpush1.msra.mxu0 0.0
  %172 = vmatprep.subr.mxu0 0.0
  %173 = vmatpush1.msra.mxu0 0.0
  %174 = vmatprep.subr.mxu0 0.0
  %175 = vmatpush1.msra.mxu0 0.0
  %176 = vmatprep.mubr.f32.mxu0 0.0
  %177 = vmatmul.mubr.f32.gmra.mrb[0].mxu0 %v110
  %v178 = vpop.f32.mrb[0].mxu0
  %v179 = vadd.f32 0.0, %v178
  %v180 = vpop.f32.mrb[0].mxu0
  %181 = vdwg.mxu0
  %v182 = vld [vmem:[%s1] sm:$0xff]
  %184 = vrot.lane.b32.xlu0 %v179, 32
  %v185 = vpop.permute.xlu0 %184
  %v187 = vmul.f32 %v182, %v185
  %vm188 = vcmask 523520
  %189 = vst.msk [vmem:[%s3] sm:$0xff] %vm188, %v187
  %v190 = vld [vmem:[%s0] sm:$0xff]
  %191 = vset.pattern.permute.xlu0 2
  %192 = vperm.xlu0 %191, %v190
  %v193 = vpop.permute.xlu0 %192
  %vm194 = vcmp.eq.s32.totalorder %v193, %v16
  %v195 = vsel %vm194, 1, 0
  %v196 = vcvt.s32.f32 %v195
  %v198 = vsel %vm24, %v196, 0
  %200 = vmatprep.subr.mxu0 0.0
  %201 = vmatpush1.msra.mxu0 %v14
  %202 = vmatprep.subr.mxu0 0.0
  %203 = vmatpush1.msra.mxu0 0.0
  %204 = vmatprep.subr.mxu0 0.0
  %205 = vmatpush1.msra.mxu0 0.0
  %206 = vmatprep.subr.mxu0 0.0
  %207 = vmatpush1.msra.mxu0 0.0
  %208 = vmatprep.subr.mxu0 0.0
  %209 = vmatpush1.msra.mxu0 0.0
  %210 = vmatprep.subr.mxu0 0.0
  %211 = vmatpush1.msra.mxu0 0.0
  %212 = vmatprep.subr.mxu0 0.0
  %213 = vmatpush1.msra.mxu0 0.0
  %214 = vmatprep.subr.mxu0 0.0
  %215 = vmatpush1.msra.mxu0 0.0
  %216 = vmatprep.subr.mxu0 0.0
  %217 = vmatpush1.msra.mxu0 0.0
  %218 = vmatprep.subr.mxu0 0.0
  %219 = vmatpush1.msra.mxu0 0.0
  %220 = vmatprep.subr.mxu0 0.0
  %221 = vmatpush1.msra.mxu0 0.0
  %222 = vmatprep.subr.mxu0 0.0
  %223 = vmatpush1.msra.mxu0 0.0
  %224 = vmatprep.subr.mxu0 0.0
  %225 = vmatpush1.msra.mxu0 0.0
  %226 = vmatprep.subr.mxu0 0.0
  %227 = vmatpush1.msra.mxu0 0.0
  %228 = vmatprep.subr.mxu0 0.0
  %229 = vmatpush1.msra.mxu0 0.0
  %230 = vmatprep.subr.mxu0 0.0
  %231 = vmatpush1.msra.mxu0 0.0
  %232 = vmatprep.subr.mxu0 0.0
  %233 = vmatpush1.msra.mxu0 0.0
  %234 = vmatprep.subr.mxu0 0.0
  %235 = vmatpush1.msra.mxu0 0.0
  %236 = vmatprep.subr.mxu0 0.0
  %237 = vmatpush1.msra.mxu0 0.0
  %238 = vmatprep.subr.mxu0 0.0
  %239 = vmatpush1.msra.mxu0 0.0
  %240 = vmatprep.subr.mxu0 0.0
  %241 = vmatpush1.msra.mxu0 0.0
  %242 = vmatprep.subr.mxu0 0.0
  %243 = vmatpush1.msra.mxu0 0.0
  %244 = vmatprep.subr.mxu0 0.0
  %245 = vmatpush1.msra.mxu0 0.0
  %246 = vmatprep.subr.mxu0 0.0
  %247 = vmatpush1.msra.mxu0 0.0
  %248 = vmatprep.subr.mxu0 0.0
  %249 = vmatpush1.msra.mxu0 0.0
  %250 = vmatprep.subr.mxu0 0.0
  %251 = vmatpush1.msra.mxu0 0.0
  %252 = vmatprep.subr.mxu0 0.0
  %253 = vmatpush1.msra.mxu0 0.0
  %254 = vmatprep.subr.mxu0 0.0
  %255 = vmatpush1.msra.mxu0 0.0
  %256 = vmatprep.subr.mxu0 0.0
  %257 = vmatpush1.msra.mxu0 0.0
  %258 = vmatprep.subr.mxu0 0.0
  %259 = vmatpush1.msra.mxu0 0.0
  %260 = vmatprep.subr.mxu0 0.0
  %261 = vmatpush1.msra.mxu0 0.0
  %262 = vmatprep.subr.mxu0 0.0
  %263 = vmatpush1.msra.mxu0 0.0
  %264 = vmatprep.mubr.f32.mxu0 0.0
  %265 = vmatmul.mubr.f32.gmra.mrb[0].mxu0 %v198
  %v266 = vpop.f32.mrb[0].mxu0
  %v267 = vadd.f32 0.0, %v266
  %v268 = vpop.f32.mrb[0].mxu0
  %269 = vdwg.mxu0
  %v270 = vld [vmem:[%s1] sm:$0xff]
  %272 = vrot.lane.b32.xlu0 %v267, 64
  %v273 = vpop.permute.xlu0 %272
  %v275 = vmul.f32 %v270, %v273
  %vm276 = vcmask 785920
  %277 = vst.msk [vmem:[%s3] sm:$0xff] %vm276, %v275
  %v278 = vld [vmem:[%s0] sm:$0xff]
  %279 = vset.pattern.permute.xlu0 3
  %280 = vperm.xlu0 %279, %v278
  %v281 = vpop.permute.xlu0 %280
  %vm282 = vcmp.eq.s32.totalorder %v281, %v16
  %v283 = vsel %vm282, 1, 0
  %v284 = vcvt.s32.f32 %v283
  %v286 = vsel %vm24, %v284, 0
  %288 = vmatprep.subr.mxu0 0.0
  %289 = vmatpush1.msra.mxu0 %v14
  %290 = vmatprep.subr.mxu0 0.0
  %291 = vmatpush1.msra.mxu0 0.0
  %292 = vmatprep.subr.mxu0 0.0
  %293 = vmatpush1.msra.mxu0 0.0
  %294 = vmatprep.subr.mxu0 0.0
  %295 = vmatpush1.msra.mxu0 0.0
  %296 = vmatprep.subr.mxu0 0.0
  %297 = vmatpush1.msra.mxu0 0.0
  %298 = vmatprep.subr.mxu0 0.0
  %299 = vmatpush1.msra.mxu0 0.0
  %300 = vmatprep.subr.mxu0 0.0
  %301 = vmatpush1.msra.mxu0 0.0
  %302 = vmatprep.subr.mxu0 0.0
  %303 = vmatpush1.msra.mxu0 0.0
  %304 = vmatprep.subr.mxu0 0.0
  %305 = vmatpush1.msra.mxu0 0.0
  %306 = vmatprep.subr.mxu0 0.0
  %307 = vmatpush1.msra.mxu0 0.0
  %308 = vmatprep.subr.mxu0 0.0
  %309 = vmatpush1.msra.mxu0 0.0
  %310 = vmatprep.subr.mxu0 0.0
  %311 = vmatpush1.msra.mxu0 0.0
  %312 = vmatprep.subr.mxu0 0.0
  %313 = vmatpush1.msra.mxu0 0.0
  %314 = vmatprep.subr.mxu0 0.0
  %315 = vmatpush1.msra.mxu0 0.0
  %316 = vmatprep.subr.mxu0 0.0
  %317 = vmatpush1.msra.mxu0 0.0
  %318 = vmatprep.subr.mxu0 0.0
  %319 = vmatpush1.msra.mxu0 0.0
  %320 = vmatprep.subr.mxu0 0.0
  %321 = vmatpush1.msra.mxu0 0.0
  %322 = vmatprep.subr.mxu0 0.0
  %323 = vmatpush1.msra.mxu0 0.0
  %324 = vmatprep.subr.mxu0 0.0
  %325 = vmatpush1.msra.mxu0 0.0
  %326 = vmatprep.subr.mxu0 0.0
  %327 = vmatpush1.msra.mxu0 0.0
  %328 = vmatprep.subr.mxu0 0.0
  %329 = vmatpush1.msra.mxu0 0.0
  %330 = vmatprep.subr.mxu0 0.0
  %331 = vmatpush1.msra.mxu0 0.0
  %332 = vmatprep.subr.mxu0 0.0
  %333 = vmatpush1.msra.mxu0 0.0
  %334 = vmatprep.subr.mxu0 0.0
  %335 = vmatpush1.msra.mxu0 0.0
  %336 = vmatprep.subr.mxu0 0.0
  %337 = vmatpush1.msra.mxu0 0.0
  %338 = vmatprep.subr.mxu0 0.0
  %339 = vmatpush1.msra.mxu0 0.0
  %340 = vmatprep.subr.mxu0 0.0
  %341 = vmatpush1.msra.mxu0 0.0
  %342 = vmatprep.subr.mxu0 0.0
  %343 = vmatpush1.msra.mxu0 0.0
  %344 = vmatprep.subr.mxu0 0.0
  %345 = vmatpush1.msra.mxu0 0.0
  %346 = vmatprep.subr.mxu0 0.0
  %347 = vmatpush1.msra.mxu0 0.0
  %348 = vmatprep.subr.mxu0 0.0
  %349 = vmatpush1.msra.mxu0 0.0
  %350 = vmatprep.subr.mxu0 0.0
  %351 = vmatpush1.msra.mxu0 0.0
  %352 = vmatprep.mubr.f32.mxu0 0.0
  %353 = vmatmul.mubr.f32.gmra.mrb[0].mxu0 %v286
  %v354 = vpop.f32.mrb[0].mxu0
  %v355 = vadd.f32 0.0, %v354
  %v356 = vpop.f32.mrb[0].mxu0
  %357 = vdwg.mxu0
  %v358 = vld [vmem:[%s1] sm:$0xff]
  %360 = vrot.lane.b32.xlu0 %v355, 96
  %v361 = vpop.permute.xlu0 %360
  %v363 = vmul.f32 %v358, %v361
  %vm364 = vcmask 1048320
  %365 = vst.msk [vmem:[%s3] sm:$0xff] %vm364, %v363
  // Predicated region
  $region14: #{graph_se_layer.3} parent=0 // pred_check
    _
  $region15: #{graph_se_layer.3} parent=0 // pred_check_branch
    %367 = sbr.rel (0) target = $region17
  $region16: #{graph_se_layer.3} parent=0 // pred_region
    _
  $region17: #{graph_se_layer.3} parent=0 // pred_fallthru
    _
  // Predicated region
  $region18: #{graph_se_layer.3} parent=0 // pred_check
    _
  $region19: #{graph_se_layer.3} parent=0 // pred_check_branch
    %369 = sbr.rel (0) target = $region21
  $region20: #{graph_se_layer.3} parent=0 // pred_region
    _
  $region21: #{graph_se_layer.3} parent=0 // pred_fallthru
    _

</llo_original>
